<compile_context>
chip_gen: v6e
topology: v6e:2x2x1
jax: 0.10.0
libtpu: 0.0.40
codegen_flags: <defaults>
</compile_context>

<pallas_src>
import functools

import jax
import jax.numpy as jnp
from jax.experimental import pallas as pl
from jax.experimental.pallas import tpu as pltpu


def _round_up(x: int, m: int) -> int:
    return (x + m - 1) // m * m


def _cdiv(a: int, b: int) -> int:
    return (a + b - 1) // b


def _loss_kernel(tok1_ref, tok2_ref, s1_ref, s2_ref, coeff_ref, out_ref,
                 cos_acc_ref, *, margin: float, gate_scale: float,
                 min_len: int, block_t: int):
    eps = 1e-8
    t = pl.program_id(1)
    nt = pl.num_programs(1)

    @pl.when(t == 0)
    def _():
        cos_acc_ref[...] = jnp.zeros_like(cos_acc_ref)

    # ---- token-level cosine similarity for this (batch tile, seq chunk) ----
    # Casts are per seq-chunk (the chunk size is bounded by block_t), so the
    # f32 working set stays small; accumulation / rsqrt are in f32.
    t1 = tok1_ref[...].astype(jnp.float32)          # (Bt, Tt, D)
    t2 = tok2_ref[...].astype(jnp.float32)
    dot_t = jnp.sum(t1 * t2, axis=-1)               # (Bt, Tt)
    n1_sq = jnp.sum(t1 * t1, axis=-1)
    n2_sq = jnp.sum(t2 * t2, axis=-1)
    cos_tok = dot_t * jax.lax.rsqrt(jnp.maximum(n1_sq * n2_sq, eps * eps))

    # Mask tokens >= min_len (last seq chunk may be partial / OOB garbage).
    tok_idx = t * block_t + jax.lax.broadcasted_iota(jnp.int32, cos_tok.shape, 1)
    cos_tok = jnp.where(tok_idx < min_len, cos_tok, 0.0)
    cos_acc_ref[...] += jnp.sum(cos_tok, axis=1, keepdims=True)   # (Bt, 1)

    @pl.when(t == nt - 1)
    def _():
        local_diff = 1.0 - cos_acc_ref[...] * (1.0 / min_len)     # (Bt, 1)

        # ---- sentence-level cosine similarity ----
        s1 = s1_ref[...].astype(jnp.float32)                      # (Bt, D)
        s2 = s2_ref[...].astype(jnp.float32)
        dot_s = jnp.sum(s1 * s2, axis=-1, keepdims=True)
        n1s = jnp.sum(s1 * s1, axis=-1, keepdims=True)
        n2s = jnp.sum(s2 * s2, axis=-1, keepdims=True)
        global_diff = 1.0 - dot_s * jax.lax.rsqrt(jnp.maximum(n1s * n2s,
                                                              eps * eps))

        # ---- context-adaptive gate + masked contrastive reduction ----
        gate = jax.nn.sigmoid(gate_scale * (global_diff - local_diff))
        final_diff = gate * global_diff + (1.0 - gate) * local_diff
        hinge = jnp.maximum(margin - final_diff, 0.0)

        coeff = coeff_ref[...]                # (Bt, 2) f32, zero on pad rows
        pos_w = coeff[:, 0:1]
        neg_w = coeff[:, 1:2]
        # Select (not multiply) so garbage / NaN rows of a partial batch tile
        # contribute exactly zero.
        per_row = (jnp.where(pos_w > 0.5, final_diff * final_diff, 0.0)
                   + jnp.where(neg_w > 0.5, hinge * hinge, 0.0))

        # Lane-dense, (8,128)-aligned per-tile partial; wrapper reads [b,0,0].
        out_ref[...] = jnp.full(out_ref.shape, jnp.sum(per_row),
                                dtype=jnp.float32)


def context_adaptive_contrastive_loss(tok1, tok2, sent1, sent2, labels,
                                      *, margin: float = 0.5,
                                      gate_scale: float = 1.0,
                                      block_b: int | None = None,
                                      block_t: int | None = None,
                                      vmem_budget_bytes: int | None = None):
    """Forward pass of ContextAdaptiveContrastiveLoss (returns the scalar loss)."""
    B, T1, D = tok1.shape
    T2 = tok2.shape[1]
    min_len = min(T1, T2)
    itemsize = jnp.dtype(tok1.dtype).itemsize
    sub_mult = max(8, 32 // max(itemsize, 1))    # 8 f32 / 16 bf16 / 32 int8

    # Truncation to min_len: normally done for free by the BlockSpec window +
    # in-kernel mask.  Only if min_len is not sublane-aligned do we slice the
    # *longer* tensor(s) (required to satisfy Mosaic's (8,128) block tiling).
    if min_len % 8 != 0:
        if T1 != min_len:
            tok1 = tok1[:, :min_len, :]
        if T2 != min_len:
            tok2 = tok2[:, :min_len, :]

    # ---- generation-aware VMEM budget / explicit scoped-VMEM limit ----
    try:
        vmem_cap = int(pltpu.get_tpu_info().vmem_capacity_bytes)
    except Exception:
        vmem_cap = 64 * 1024 * 1024              # conservative (v7x per-TC)
    if vmem_budget_bytes is None:
        # ~48 MiB on v7x (64 MiB physical), ~96 MiB on v5e/v6e (128 MiB).
        vmem_budget_bytes = min((vmem_cap * 3) // 4, 96 * 1024 * 1024)
    vmem_budget_bytes = min(vmem_budget_bytes, (vmem_cap * 3) // 4)
    vmem_limit_bytes = min(vmem_cap, vmem_budget_bytes + (16 << 20))

    # ---- seq-chunk size (second-to-last dim of the token block) ----
    if min_len % 8 != 0:
        block_t = min_len                         # == full dim of both inputs
    elif block_t is None:
        block_t = min(min_len, 256)
        block_t = max((block_t // sub_mult) * sub_mult, 8)
    else:
        block_t = max(8, min((block_t // 8) * 8, min_len))

    # ---- batch-tile size from the *real* VMEM working set ----
    # Per token element: 2 tensors x 2 pipeline buffers in the native dtype
    # plus ~12 B of f32 intermediates (casts / products / squared norms).
    per_tok_elem = 4 * itemsize + 12
    per_sent_elem = 4 * itemsize + 8
    bytes_per_row = (block_t * D * per_tok_elem + D * per_sent_elem
                     + 2 * 2 * 4 + 512)           # coeff (f32, dbl-buf) + scratch
    if block_b is None:
        rows = max(8, vmem_budget_bytes // bytes_per_row)
        block_b = int(max(8, min((rows // sub_mult) * sub_mult, 1024)))
    block_b = max(8, (block_b // 8) * 8)
    block_b = min(block_b, _round_up(B, 8))
    if B > 8 and block_b >= B:
        # Keep >= 2 batch tiles so the "parallel" axis feeds both v7x cores.
        block_b = max(8, _round_up(_cdiv(B, 2), 8))

    grid_b = _cdiv(B, block_b)
    grid_t = _cdiv(min_len, block_t)
    b_pad = grid_b * block_b

    # Positive / negative coefficients from integer labels (mirrors labels==1 /
    # labels==0; other label values contribute nothing).  Only this tiny array
    # is padded — the (B, T, D) inputs are never padded or copied.
    lab = labels.reshape(B).astype(jnp.int32)
    coeff = jnp.stack([(lab == 1).astype(jnp.float32),
                       (lab == 0).astype(jnp.float32)], axis=-1)   # (B, 2)
    if b_pad != B:
        coeff = jnp.pad(coeff, ((0, b_pad - B), (0, 0)))

    kernel = functools.partial(_loss_kernel, margin=float(margin),
                               gate_scale=float(gate_scale),
                               min_len=int(min_len), block_t=int(block_t))

    cost = pl.CostEstimate(
        flops=8 * B * min_len * D + 16 * B * D,
        transcendentals=2 * B * (min_len + 2),
        bytes_accessed=(2 * B * min_len * D + 2 * B * D) * itemsize
                       + b_pad * 2 * 4 + grid_b * 8 * 128 * 4)

    out = pl.pallas_call(
        kernel,
        out_shape=jax.ShapeDtypeStruct((grid_b, 8, 128), jnp.float32),
        grid=(grid_b, grid_t),
        in_specs=[
            pl.BlockSpec((block_b, block_t, D), lambda b, t: (b, t, 0)),  # tok1
            pl.BlockSpec((block_b, block_t, D), lambda b, t: (b, t, 0)),  # tok2
            pl.BlockSpec((block_b, D), lambda b, t: (b, 0)),              # sent1
            pl.BlockSpec((block_b, D), lambda b, t: (b, 0)),              # sent2
            pl.BlockSpec((block_b, 2), lambda b, t: (b, 0)),              # coeff
        ],
        out_specs=pl.BlockSpec((1, 8, 128), lambda b, t: (b, 0, 0)),
        scratch_shapes=[pltpu.VMEM((block_b, 1), jnp.float32)],
        compiler_params=pltpu.CompilerParams(
            dimension_semantics=("parallel", "arbitrary"),
            vmem_limit_bytes=int(vmem_limit_bytes)),
        cost_estimate=cost,
    )(tok1, tok2, sent1, sent2, coeff)

    # Tiny host-side reduction over the per-tile partials.
    return jnp.sum(out[:, 0, 0])


def _reference_loss(tok1, tok2, sent1, sent2, labels, margin=0.5,
                    gate_scale=1.0):
    """Pure-JAX reference mirroring the PyTorch forward."""
    eps = 1e-8
    min_len = min(tok1.shape[1], tok2.shape[1])
    t1 = tok1[:, :min_len].astype(jnp.float32)
    t2 = tok2[:, :min_len].astype(jnp.float32)
    s1 = sent1.astype(jnp.float32)
    s2 = sent2.astype(jnp.float32)
    cos_tok = jnp.sum(t1 * t2, -1) / jnp.maximum(
        jnp.linalg.norm(t1, axis=-1) * jnp.linalg.norm(t2, axis=-1), eps)
    local_diff = 1.0 - cos_tok.mean(axis=1)
    cos_sent = jnp.sum(s1 * s2, -1) / jnp.maximum(
        jnp.linalg.norm(s1, axis=-1) * jnp.linalg.norm(s2, axis=-1), eps)
    global_diff = 1.0 - cos_sent
    gate = jax.nn.sigmoid(gate_scale * (global_diff - local_diff))
    final_diff = gate * global_diff + (1.0 - gate) * local_diff
    pos = jnp.where(labels == 1, final_diff ** 2, 0.0).sum()
    neg = jnp.where(labels == 0,
                    jnp.maximum(margin - final_diff, 0.0) ** 2, 0.0).sum()
    return pos + neg


if __name__ == "__main__":
    key = jax.random.PRNGKey(0)
    k1, k2, k3, k4 = jax.random.split(key, 4)

    B, T, D = 16, 8, 128   # batch, seq, hidden (small demo shapes)

    # Synthetic "model outputs": token embeddings for the two sentence
    # branches; sentence embeddings via mean pooling (a standard
    # SentenceTransformer pooling head).
    tok1 = jax.random.normal(k1, (B, T, D), dtype=jnp.float32)
    tok2 = jax.random.normal(k2, (B, T, D), dtype=jnp.float32)
    sent1 = jnp.mean(tok1, axis=1)   # (B, D)
    sent2 = jnp.mean(tok2, axis=1)   # (B, D)
    labels = jax.random.bernoulli(k3, 0.5, (B,)).astype(jnp.int32)

    # 1) Multi-tile path (2 batch tiles, "parallel" batch axis).
    loss = context_adaptive_contrastive_loss(
        tok1, tok2, sent1, sent2, labels, margin=0.5, gate_scale=1.0, block_b=8)
    loss = jax.block_until_ready(loss)
    ref = _reference_loss(tok1, tok2, sent1, sent2, labels)
    assert jnp.allclose(loss, ref, atol=1e-5, rtol=1e-5), (loss, ref)

    # 2) Ragged batch (B not a multiple of the tile): big inputs are NOT
    #    padded; garbage rows of the partial tile are masked in-kernel.
    Br = 11
    loss_r = context_adaptive_contrastive_loss(
        tok1[:Br], tok2[:Br], sent1[:Br], sent2[:Br], labels[:Br],
        margin=0.5, gate_scale=1.0, block_b=8)
    loss_r = jax.block_until_ready(loss_r)
    ref_r = _reference_loss(tok1[:Br], tok2[:Br], sent1[:Br], sent2[:Br],
                            labels[:Br])
    assert jnp.allclose(loss_r, ref_r, atol=1e-5, rtol=1e-5), (loss_r, ref_r)

    # 3) Mismatched sequence lengths + multi-step seq-chunk accumulation
    #    (BlockSpec window truncates the longer stream, no wrapper slice;
    #    block_b autotuned, >= 2 tiles enforced).
    T1m, T2m = 24, 16
    tok1m = jax.random.normal(k4, (B, T1m, D), dtype=jnp.float32)
    tok2m = jax.random.normal(k2, (B, T2m, D), dtype=jnp.float32)
    sent1m = jnp.mean(tok1m, axis=1)
    sent2m = jnp.mean(tok2m, axis=1)
    loss_m = context_adaptive_contrastive_loss(
        tok1m, tok2m, sent1m, sent2m, labels,
        margin=0.5, gate_scale=1.0, block_t=8)
    loss_m = jax.block_until_ready(loss_m)
    ref_m = _reference_loss(tok1m, tok2m, sent1m, sent2m, labels)
    assert jnp.allclose(loss_m, ref_m, atol=1e-5, rtol=1e-5), (loss_m, ref_m)

    # TODO(synk): wandb gate-statistics logging / self.last_metrics / call_count
    # bookkeeping are host-side side effects with no Pallas equivalent; omitted.
    print("KERNEL_OK")
</pallas_src>

<mosaic_0001>
module attributes {stable_mosaic.version = 11 : i64} {
  func.func @_loss_kernel(%arg0: i32, %arg1: i32, %arg2: memref<8x8x128xf32, #tpu.memory_space<vmem>>, %arg3: memref<8x8x128xf32, #tpu.memory_space<vmem>>, %arg4: memref<8x128xf32, #tpu.memory_space<vmem>>, %arg5: memref<8x128xf32, #tpu.memory_space<vmem>>, %arg6: memref<8x2xf32, #tpu.memory_space<vmem>>, %arg7: memref<1x8x128xf32, #tpu.memory_space<vmem>>, %arg8: memref<8x1xf32, #tpu.memory_space<vmem>>) attributes {dimension_semantics = [#tpu.dimension_semantics<parallel>, #tpu.dimension_semantics<arbitrary>], iteration_bounds = array<i64: 2, 1>, scalar_prefetch = 0 : i64, scratch_operands = 1 : i64, tpu.core_type = #tpu.core_type<tc>, window_params = [{transform_indices = @transform_0, window_bounds = array<i64: 8, 8, 128>}, {transform_indices = @transform_1, window_bounds = array<i64: 8, 8, 128>}, {transform_indices = @transform_2, window_bounds = array<i64: 8, 128>}, {transform_indices = @transform_3, window_bounds = array<i64: 8, 128>}, {transform_indices = @transform_4, window_bounds = array<i64: 8, 2>}, {transform_indices = @transform_5, window_bounds = array<i64: 1, 8, 128>}]} {
    %c0_i32 = arith.constant 0 : i32
    %0 = arith.cmpi eq, %arg1, %c0_i32 : i32
    %1 = arith.extui %0 : i1 to i32
    %c0_i32_0 = arith.constant 0 : i32
    %2 = arith.cmpi ne, %1, %c0_i32_0 : i32
    scf.if %2 {
      %cst_18 = arith.constant 0.000000e+00 : f32
      %32 = vector.broadcast %cst_18 : f32 to vector<8x1xf32>
      %c0_19 = arith.constant 0 : index
      %c0_20 = arith.constant 0 : index
      %33 = vector.load %arg8[%c0_19, %c0_20] : memref<8x1xf32, #tpu.memory_space<vmem>>, vector<8x1xf32>
      tpu.vector_store %arg8[%c0_19, %c0_20], %32 {strides = array<i32>} : memref<8x1xf32, #tpu.memory_space<vmem>>, vector<8x1xf32>,
    } else {
    }
    %c0 = arith.constant 0 : index
    %c0_1 = arith.constant 0 : index
    %c0_2 = arith.constant 0 : index
    %3 = vector.load %arg2[%c0, %c0_1, %c0_2] : memref<8x8x128xf32, #tpu.memory_space<vmem>>, vector<8x8x128xf32>
    %c0_3 = arith.constant 0 : index
    %c0_4 = arith.constant 0 : index
    %c0_5 = arith.constant 0 : index
    %4 = vector.load %arg3[%c0_3, %c0_4, %c0_5] : memref<8x8x128xf32, #tpu.memory_space<vmem>>, vector<8x8x128xf32>
    %5 = arith.mulf %3, %4 : vector<8x8x128xf32>
    %cst = arith.constant dense<0.000000e+00> : vector<8x8xf32>
    %6 = vector.multi_reduction <add>, %5, %cst [2] : vector<8x8x128xf32> to vector<8x8xf32>
    %7 = arith.mulf %3, %3 : vector<8x8x128xf32>
    %cst_6 = arith.constant dense<0.000000e+00> : vector<8x8xf32>
    %8 = vector.multi_reduction <add>, %7, %cst_6 [2] : vector<8x8x128xf32> to vector<8x8xf32>
    %9 = arith.mulf %4, %4 : vector<8x8x128xf32>
    %cst_7 = arith.constant dense<0.000000e+00> : vector<8x8xf32>
    %10 = vector.multi_reduction <add>, %9, %cst_7 [2] : vector<8x8x128xf32> to vector<8x8xf32>
    %11 = arith.mulf %8, %10 : vector<8x8xf32>
    %cst_8 = arith.constant 1.000000e-16 : f32
    %12 = vector.broadcast %cst_8 : f32 to vector<8x8xf32>
    %13 = arith.maximumf %11, %12 : vector<8x8xf32>
    %14 = math.rsqrt %13 : vector<8x8xf32>
    %15 = arith.mulf %6, %14 : vector<8x8xf32>
    %c8_i32 = arith.constant 8 : i32
    %16 = arith.muli %arg1, %c8_i32 : i32
    %17 = tpu.iota {dimensions = array<i32: 1>} : vector<8x8xi32>
    %18 = vector.broadcast %16 : i32 to vector<8x8xi32>
    %19 = arith.addi %18, %17 : vector<8x8xi32>
    %c8_i32_9 = arith.constant 8 : i32
    %20 = vector.broadcast %c8_i32_9 : i32 to vector<8x8xi32>
    %21 = arith.cmpi slt, %19, %20 : vector<8x8xi32>
    %cst_10 = arith.constant 0.000000e+00 : f32
    %22 = vector.broadcast %cst_10 : f32 to vector<8x8xf32>
    %23 = arith.select %21, %15, %22 : vector<8x8xi1>, vector<8x8xf32>
    %c0_11 = arith.constant 0 : index
    %c0_12 = arith.constant 0 : index
    %24 = vector.load %arg8[%c0_11, %c0_12] : memref<8x1xf32, #tpu.memory_space<vmem>>, vector<8x1xf32>
    %cst_13 = arith.constant dense<0.000000e+00> : vector<8xf32>
    %25 = vector.multi_reduction <add>, %23, %cst_13 [1] : vector<8x8xf32> to vector<8xf32>
    %26 = vector.shape_cast %25 : vector<8xf32> to vector<8x1xf32>
    %27 = arith.addf %24, %26 : vector<8x1xf32>
    %c0_14 = arith.constant 0 : index
    %c0_15 = arith.constant 0 : index
    %28 = vector.load %arg8[%c0_14, %c0_15] : memref<8x1xf32, #tpu.memory_space<vmem>>, vector<8x1xf32>
    tpu.vector_store %arg8[%c0_14, %c0_15], %27 {strides = array<i32>} : memref<8x1xf32, #tpu.memory_space<vmem>>, vector<8x1xf32>,
    %c0_i32_16 = arith.constant 0 : i32
    %29 = arith.cmpi eq, %arg1, %c0_i32_16 : i32
    %30 = arith.extui %29 : i1 to i32
    %c0_i32_17 = arith.constant 0 : i32
    %31 = arith.cmpi ne, %30, %c0_i32_17 : i32
    scf.if %31 {
      %c0_18 = arith.constant 0 : index
      %c0_19 = arith.constant 0 : index
      %32 = vector.load %arg8[%c0_18, %c0_19] : memref<8x1xf32, #tpu.memory_space<vmem>>, vector<8x1xf32>
      %cst_20 = arith.constant 1.250000e-01 : f32
      %33 = vector.broadcast %cst_20 : f32 to vector<8x1xf32>
      %34 = arith.mulf %32, %33 : vector<8x1xf32>
      %cst_21 = arith.constant 1.000000e+00 : f32
      %35 = vector.broadcast %cst_21 : f32 to vector<8x1xf32>
      %36 = arith.subf %35, %34 : vector<8x1xf32>
      %c0_22 = arith.constant 0 : index
      %c0_23 = arith.constant 0 : index
      %37 = vector.load %arg4[%c0_22, %c0_23] : memref<8x128xf32, #tpu.memory_space<vmem>>, vector<8x128xf32>
      %c0_24 = arith.constant 0 : index
      %c0_25 = arith.constant 0 : index
      %38 = vector.load %arg5[%c0_24, %c0_25] : memref<8x128xf32, #tpu.memory_space<vmem>>, vector<8x128xf32>
      %39 = arith.mulf %37, %38 : vector<8x128xf32>
      %cst_26 = arith.constant dense<0.000000e+00> : vector<8xf32>
      %40 = vector.multi_reduction <add>, %39, %cst_26 [1] : vector<8x128xf32> to vector<8xf32>
      %41 = vector.shape_cast %40 : vector<8xf32> to vector<8x1xf32>
      %42 = arith.mulf %37, %37 : vector<8x128xf32>
      %cst_27 = arith.constant dense<0.000000e+00> : vector<8xf32>
      %43 = vector.multi_reduction <add>, %42, %cst_27 [1] : vector<8x128xf32> to vector<8xf32>
      %44 = vector.shape_cast %43 : vector<8xf32> to vector<8x1xf32>
      %45 = arith.mulf %38, %38 : vector<8x128xf32>
      %cst_28 = arith.constant dense<0.000000e+00> : vector<8xf32>
      %46 = vector.multi_reduction <add>, %45, %cst_28 [1] : vector<8x128xf32> to vector<8xf32>
      %47 = vector.shape_cast %46 : vector<8xf32> to vector<8x1xf32>
      %48 = arith.mulf %44, %47 : vector<8x1xf32>
      %cst_29 = arith.constant 1.000000e-16 : f32
      %49 = vector.broadcast %cst_29 : f32 to vector<8x1xf32>
      %50 = arith.maximumf %48, %49 : vector<8x1xf32>
      %51 = math.rsqrt %50 : vector<8x1xf32>
      %52 = arith.mulf %41, %51 : vector<8x1xf32>
      %cst_30 = arith.constant 1.000000e+00 : f32
      %53 = vector.broadcast %cst_30 : f32 to vector<8x1xf32>
      %54 = arith.subf %53, %52 : vector<8x1xf32>
      %55 = arith.subf %54, %36 : vector<8x1xf32>
      %cst_31 = arith.constant 1.000000e+00 : f32
      %56 = vector.broadcast %cst_31 : f32 to vector<8x1xf32>
      %57 = arith.mulf %56, %55 : vector<8x1xf32>
      %58 = arith.negf %57 : vector<8x1xf32>
      %59 = math.exp %58 : vector<8x1xf32>
      %cst_32 = arith.constant 1.000000e+00 : f32
      %60 = vector.broadcast %cst_32 : f32 to vector<8x1xf32>
      %61 = arith.addf %60, %59 : vector<8x1xf32>
      %62 = arith.divf %60, %61 : vector<8x1xf32>
      %63 = arith.mulf %62, %54 : vector<8x1xf32>
      %cst_33 = arith.constant 1.000000e+00 : f32
      %64 = vector.broadcast %cst_33 : f32 to vector<8x1xf32>
      %65 = arith.subf %64, %62 : vector<8x1xf32>
      %66 = arith.mulf %65, %36 : vector<8x1xf32>
      %67 = arith.addf %63, %66 : vector<8x1xf32>
      %cst_34 = arith.constant 5.000000e-01 : f32
      %68 = vector.broadcast %cst_34 : f32 to vector<8x1xf32>
      %69 = arith.subf %68, %67 : vector<8x1xf32>
      %cst_35 = arith.constant 0.000000e+00 : f32
      %70 = vector.broadcast %cst_35 : f32 to vector<8x1xf32>
      %71 = arith.maximumf %69, %70 : vector<8x1xf32>
      %c0_36 = arith.constant 0 : index
      %c0_37 = arith.constant 0 : index
      %72 = vector.load %arg6[%c0_36, %c0_37] : memref<8x2xf32, #tpu.memory_space<vmem>>, vector<8x2xf32>
      %73 = vector.extract_strided_slice %72 {offsets = [0, 0], sizes = [8, 1], strides = [1, 1]} : vector<8x2xf32> to vector<8x1xf32>
      %74 = vector.extract_strided_slice %72 {offsets = [0, 1], sizes = [8, 1], strides = [1, 1]} : vector<8x2xf32> to vector<8x1xf32>
      %cst_38 = arith.constant 5.000000e-01 : f32
      %75 = vector.broadcast %cst_38 : f32 to vector<8x1xf32>
      %76 = arith.cmpf ogt, %73, %75 : vector<8x1xf32>
      %77 = arith.mulf %67, %67 : vector<8x1xf32>
      %cst_39 = arith.constant 0.000000e+00 : f32
      %78 = vector.broadcast %cst_39 : f32 to vector<8x1xf32>
      %79 = arith.select %76, %77, %78 : vector<8x1xi1>, vector<8x1xf32>
      %cst_40 = arith.constant 5.000000e-01 : f32
      %80 = vector.broadcast %cst_40 : f32 to vector<8x1xf32>
      %81 = arith.cmpf ogt, %74, %80 : vector<8x1xf32>
      %82 = arith.mulf %71, %71 : vector<8x1xf32>
      %cst_41 = arith.constant 0.000000e+00 : f32
      %83 = vector.broadcast %cst_41 : f32 to vector<8x1xf32>
      %84 = arith.select %81, %82, %83 : vector<8x1xi1>, vector<8x1xf32>
      %85 = arith.addf %79, %84 : vector<8x1xf32>
      %86 = vector.shape_cast %85 : vector<8x1xf32> to vector<1x8x1xf32>
      %cst_42 = arith.constant dense<0.000000e+00> : vector<1xf32>
      %87 = vector.multi_reduction <add>, %86, %cst_42 [1, 2] : vector<1x8x1xf32> to vector<1xf32>
      %88 = vector.shape_cast %87 : vector<1xf32> to vector<1x1x1xf32>
      %89 = vector.extract %88[0, 0, 0] : f32 from vector<1x1x1xf32>
      %90 = vector.broadcast %89 : f32 to vector<1x8x128xf32>
      %c0_43 = arith.constant 0 : index
      %c0_44 = arith.constant 0 : index
      %c0_45 = arith.constant 0 : index
      %91 = vector.load %arg7[%c0_43, %c0_44, %c0_45] : memref<1x8x128xf32, #tpu.memory_space<vmem>>, vector<1x8x128xf32>
      tpu.vector_store %arg7[%c0_43, %c0_44, %c0_45], %90 {strides = array<i32>} : memref<1x8x128xf32, #tpu.memory_space<vmem>>, vector<1x8x128xf32>,
    } else {
    }
    return
  }
  func.func @transform_0(%arg0: i32, %arg1: i32) -> (i32, i32, i32) {
    %c0_i32 = arith.constant 0 : i32
    %c0_i32_0 = arith.constant 0 : i32
    return %arg0, %arg1, %c0_i32 : i32, i32, i32
  }
  func.func @transform_1(%arg0: i32, %arg1: i32) -> (i32, i32, i32) {
    %c0_i32 = arith.constant 0 : i32
    %c0_i32_0 = arith.constant 0 : i32
    return %arg0, %arg1, %c0_i32 : i32, i32, i32
  }
  func.func @transform_2(%arg0: i32, %arg1: i32) -> (i32, i32) {
    %c0_i32 = arith.constant 0 : i32
    %c0_i32_0 = arith.constant 0 : i32
    return %arg0, %c0_i32 : i32, i32
  }
  func.func @transform_3(%arg0: i32, %arg1: i32) -> (i32, i32) {
    %c0_i32 = arith.constant 0 : i32
    %c0_i32_0 = arith.constant 0 : i32
    return %arg0, %c0_i32 : i32, i32
  }
  func.func @transform_4(%arg0: i32, %arg1: i32) -> (i32, i32) {
    %c0_i32 = arith.constant 0 : i32
    %c0_i32_0 = arith.constant 0 : i32
    return %arg0, %c0_i32 : i32, i32
  }
  func.func @transform_5(%arg0: i32, %arg1: i32) -> (i32, i32, i32) {
    %c0_i32 = arith.constant 0 : i32
    %c0_i32_0 = arith.constant 0 : i32
    %c0_i32_1 = arith.constant 0 : i32
    return %arg0, %c0_i32, %c0_i32_0 : i32, i32, i32
  }
}

</mosaic_0001>

<llo_original>
// kernel: tpu_custom_call.1
$region0: #{tpu_custom_call.1}
  #allocation0 [shape = 'u32[]', space=smem, size = 0x4, offset = 0x4, fixed_abs, tag = 'smem constant byte address 0x4 - core index']
  #allocation1 [shape = 'u32[144,128]{1,0:T(1,128)}', space=vmem, size = 0x12000, scoped, tag = 'internal scratch']
  #allocation2 [shape = 'f32[8,1]{1,0:T(8,128)}', space=vmem, size = 0x1000, scoped, tag = 'scratch operand']
  %s0 = inlined_call_operand.hbm [shape: f32[16,8,128], index: 0, kind: input, shape index: {}]
  %s1 = inlined_call_operand.hbm [shape: f32[16,8,128], index: 1, kind: input, shape index: {}]
  %s2 = inlined_call_operand.vmem [shape: f32[16,128], index: 2, kind: input, shape index: {}]
  %s3 = inlined_call_operand.hbm [shape: f32[16,128], index: 3, kind: input, shape index: {}]
  %s4 = inlined_call_operand.vmem [shape: f32[16,2], index: 4, kind: input, shape index: {}]
  %s5 = inlined_call_operand.hbm [shape: f32[2,8,128], index: 5, kind: output, shape index: {}]
  %s6 = sld [smem:[#allocation0]]
  $region73: #{tpu_custom_call.1} parent=0
    _
  %s8 = ssub.s32 1, %s6
  %s9 = scalar_select 0, %s8, %s6
  $region1: #{tpu_custom_call.1} parent=0
    #allocation3 [shape = 'u8[65536]{0}', space=vmem, size = 0x10000, scoped, tag = 'input window, operand 0']
    #allocation4 [shape = 's32[2]{0}', space=sflag, size = 0x8, scoped, tag = 'scoped memory for tpu_custom_call.1']
    #allocation5 [shape = 's32[2]{0}', space=sflag, size = 0x8, scoped, tag = 'scoped memory for tpu_custom_call.1']
    #allocation6 [shape = 'u8[65536]{0}', space=vmem, size = 0x10000, scoped, tag = 'input window, operand 1']
    #allocation7 [shape = 's32[2]{0}', space=sflag, size = 0x8, scoped, tag = 'scoped memory for tpu_custom_call.1']
    #allocation8 [shape = 'u8[8192]{0}', space=vmem, size = 0x2000, scoped, tag = 'input window, operand 3']
    #allocation9 [shape = 'u8[8192]{0}', space=vmem, size = 0x2000, scoped, tag = 'output window, operand 0']
    %10 = vsyncpa [#allocation4], 0
    %s11 = scalar_lea.sflag [#allocation4], 1
    %12 = vsyncpa %s11, 0
    %13 = vsyncpa [#allocation7], 0
    %s14 = scalar_lea.sflag [#allocation7], 1
    %15 = vsyncpa %s14, 0
    %16 = vsyncpa [#allocation5], 0
    %s17 = scalar_lea.sflag [#allocation5], 1
    %18 = vsyncpa %s17, 0
    loop: start=0, step=1, limit=4
    $region2: #{tpu_custom_call.1} parent=1 // loop_pre_header
      _
    $region3: #{tpu_custom_call.1} parent=1 // loop_header
      %s20 = sphi 0, %s24
      %p21 = scmp.ge.s32.totalorder %s20, 4
      %s27 = sphi 0, %s39
      %s28 = sphi 0, %s35
      %s29 = sphi 0, %s27
      %s30 = sphi 0, %s28
      %s31 = sphi 0, %s29
      %s32 = sphi 0, %s30
      %s44 = sphi 0, %s46
      %s47 = sphi 0, %s44
      %s48 = sphi 0, %s47
      %s64 = sphi 0, %s48
      %s72 = sphi 0, %s74
      %s75 = sphi 0, %s72
      %s76 = sphi 0, %s75
      %s92 = sphi 0, %s76
      %s98 = sphi 0, %s100
      %s101 = sphi 0, %s98
      %s102 = sphi 0, %s101
      %s118 = sphi 0, %s102
      %s124 = sphi 0, %s126
      %s127 = sphi 0, %s124
      %s128 = sphi 0, %s127
      %s144 = sphi 0, %s128
      %s150 = sphi 0, %s152
      %s153 = sphi 0, %s150
      %s154 = sphi 0, %s153
      %s170 = sphi 0, %s154
      %s176 = sphi 0, %s178
      %s179 = sphi 0, %s176
      %s180 = sphi 0, %s179
      %s196 = sphi 0, %s180
    $region4: #{tpu_custom_call.1} parent=1 // loop_header_branch
      %23 = sbr.rel (%p21) target = $region8
    $region5: #{tpu_custom_call.1} parent=1 // loop_body
      %s25 = ssub.s32 %s20, 1
      %s26 = ssub.s32 %s20, 2
      %s33 = sadd.s32 1, %s28
      %p34 = scmp.ge.s32.totalorder %s33, 1
      %s35 = scalar_select %p34, 0, %s33
      %s36 = sadd.s32 1, %s27
      %s37 = scalar_select %p34, %s36, %s27
      %p38 = scmp.ge.s32.totalorder %s37, 2
      %s39 = scalar_select %p38, 0, %s37
      %s40 = ssub.s32 %s27, %s39
      %s41 = ssub.s32 %s28, %s35
      %s42 = sor.u32 %s40, %s41
      %p43 = scmp.eq.s32.totalorder %s42, 0
      %s45 = sadd.s32 %s44, 1
      %s46 = scalar_select %p43, %s44, %s45
      %p49 = pneg %p43
      %p50 = scmp.eq.s32.totalorder %s20, 1
      %p51 = por %p49, %p50
      %p52 = scmp.ne.s32.totalorder %s44, %s47
      %p53 = scmp.eq.s32.totalorder %s20, 0
      %p54 = por %p52, %p53
      %p55 = scmp.ne.s32.totalorder %s44, %s47
      %p56 = scmp.eq.s32.totalorder %s25, 1
      %p57 = por %p55, %p56
      %p58 = scmp.ne.s32.totalorder %s47, %s48
      %p59 = scmp.eq.s32.totalorder %s25, 0
      %p60 = por %p58, %p59
      %p61 = scmp.ne.s32.totalorder %s47, %s48
      %p62 = scmp.eq.s32.totalorder %s26, 1
      %p63 = por %p61, %p62
      %p65 = scmp.ne.s32.totalorder %s48, %s64
      %p66 = scmp.eq.s32.totalorder %s26, 0
      %p67 = por %p65, %p66
      %s68 = ssub.s32 %s27, %s39
      %s69 = ssub.s32 %s28, %s35
      %s70 = sor.u32 %s68, %s69
      %p71 = scmp.eq.s32.totalorder %s70, 0
      %s73 = sadd.s32 %s72, 1
      %s74 = scalar_select %p71, %s72, %s73
      %p77 = pneg %p71
      %p78 = scmp.eq.s32.totalorder %s20, 1
      %p79 = por %p77, %p78
      %p80 = scmp.ne.s32.totalorder %s72, %s75
      %p81 = scmp.eq.s32.totalorder %s20, 0
      %p82 = por %p80, %p81
      %p83 = scmp.ne.s32.totalorder %s72, %s75
      %p84 = scmp.eq.s32.totalorder %s25, 1
      %p85 = por %p83, %p84
      %p86 = scmp.ne.s32.totalorder %s75, %s76
      %p87 = scmp.eq.s32.totalorder %s25, 0
      %p88 = por %p86, %p87
      %p89 = scmp.ne.s32.totalorder %s75, %s76
      %p90 = scmp.eq.s32.totalorder %s26, 1
      %p91 = por %p89, %p90
      %p93 = scmp.ne.s32.totalorder %s76, %s92
      %p94 = scmp.eq.s32.totalorder %s26, 0
      %p95 = por %p93, %p94
      %s96 = ssub.s32 %s27, %s39
      %p97 = scmp.eq.s32.totalorder %s96, 0
      %s99 = sadd.s32 %s98, 1
      %s100 = scalar_select %p97, %s98, %s99
      %p103 = pneg %p97
      %p104 = scmp.eq.s32.totalorder %s20, 1
      %p105 = por %p103, %p104
      %p106 = scmp.ne.s32.totalorder %s98, %s101
      %p107 = scmp.eq.s32.totalorder %s20, 0
      %p108 = por %p106, %p107
      %p109 = scmp.ne.s32.totalorder %s98, %s101
      %p110 = scmp.eq.s32.totalorder %s25, 1
      %p111 = por %p109, %p110
      %p112 = scmp.ne.s32.totalorder %s101, %s102
      %p113 = scmp.eq.s32.totalorder %s25, 0
      %p114 = por %p112, %p113
      %p115 = scmp.ne.s32.totalorder %s101, %s102
      %p116 = scmp.eq.s32.totalorder %s26, 1
      %p117 = por %p115, %p116
      %p119 = scmp.ne.s32.totalorder %s102, %s118
      %p120 = scmp.eq.s32.totalorder %s26, 0
      %p121 = por %p119, %p120
      %s122 = ssub.s32 %s27, %s39
      %p123 = scmp.eq.s32.totalorder %s122, 0
      %s125 = sadd.s32 %s124, 1
      %s126 = scalar_select %p123, %s124, %s125
      %p129 = pneg %p123
      %p130 = scmp.eq.s32.totalorder %s20, 1
      %p131 = por %p129, %p130
      %p132 = scmp.ne.s32.totalorder %s124, %s127
      %p133 = scmp.eq.s32.totalorder %s20, 0
      %p134 = por %p132, %p133
      %p135 = scmp.ne.s32.totalorder %s124, %s127
      %p136 = scmp.eq.s32.totalorder %s25, 1
      %p137 = por %p135, %p136
      %p138 = scmp.ne.s32.totalorder %s127, %s128
      %p139 = scmp.eq.s32.totalorder %s25, 0
      %p140 = por %p138, %p139
      %p141 = scmp.ne.s32.totalorder %s127, %s128
      %p142 = scmp.eq.s32.totalorder %s26, 1
      %p143 = por %p141, %p142
      %p145 = scmp.ne.s32.totalorder %s128, %s144
      %p146 = scmp.eq.s32.totalorder %s26, 0
      %p147 = por %p145, %p146
      %s148 = ssub.s32 %s27, %s39
      %p149 = scmp.eq.s32.totalorder %s148, 0
      %s151 = sadd.s32 %s150, 1
      %s152 = scalar_select %p149, %s150, %s151
      %p155 = pneg %p149
      %p156 = scmp.eq.s32.totalorder %s20, 1
      %p157 = por %p155, %p156
      %p158 = scmp.ne.s32.totalorder %s150, %s153
      %p159 = scmp.eq.s32.totalorder %s20, 0
      %p160 = por %p158, %p159
      %p161 = scmp.ne.s32.totalorder %s150, %s153
      %p162 = scmp.eq.s32.totalorder %s25, 1
      %p163 = por %p161, %p162
      %p164 = scmp.ne.s32.totalorder %s153, %s154
      %p165 = scmp.eq.s32.totalorder %s25, 0
      %p166 = por %p164, %p165
      %p167 = scmp.ne.s32.totalorder %s153, %s154
      %p168 = scmp.eq.s32.totalorder %s26, 1
      %p169 = por %p167, %p168
      %p171 = scmp.ne.s32.totalorder %s154, %s170
      %p172 = scmp.eq.s32.totalorder %s26, 0
      %p173 = por %p171, %p172
      %s174 = ssub.s32 %s27, %s39
      %p175 = scmp.eq.s32.totalorder %s174, 0
      %s177 = sadd.s32 %s176, 1
      %s178 = scalar_select %p175, %s176, %s177
      %p181 = pneg %p175
      %p182 = scmp.eq.s32.totalorder %s20, 1
      %p183 = por %p181, %p182
      %p184 = scmp.ne.s32.totalorder %s176, %s179
      %p185 = scmp.eq.s32.totalorder %s20, 0
      %p186 = por %p184, %p185
      %p187 = scmp.ne.s32.totalorder %s176, %s179
      %p188 = scmp.eq.s32.totalorder %s25, 1
      %p189 = por %p187, %p188
      %p190 = scmp.ne.s32.totalorder %s179, %s180
      %p191 = scmp.eq.s32.totalorder %s25, 0
      %p192 = por %p190, %p191
      %p193 = scmp.ne.s32.totalorder %s179, %s180
      %p194 = scmp.eq.s32.totalorder %s26, 1
      %p195 = por %p193, %p194
      %p197 = scmp.ne.s32.totalorder %s180, %s196
      %p198 = scmp.eq.s32.totalorder %s26, 0
      %p199 = por %p197, %p198
      %p200 = scmp.le.s32.totalorder 1, %s20
      %p201 = scmp.lt.s32.totalorder %s20, 3
      %p202 = pnand %p200, %p201
      %p203 = pneg %p202
      // Predicated region
      $region9: #{tpu_custom_call.1} parent=5 // pred_check
        _
      $region10: #{tpu_custom_call.1} parent=5 // pred_check_branch
        %205 = sbr.rel (%p202) target = $region12
      $region11: #{tpu_custom_call.1} parent=5 // pred_region
        %s206 = ssub.s32 %s20, 1
      $region12: #{tpu_custom_call.1} parent=5 // pred_fallthru
        _
      %p207 = scmp.lt.s32.totalorder %s20, 2
      // Predicated region
      $region13: #{tpu_custom_call.1} parent=5 // pred_check
        %p208 = pneg %p207
      $region14: #{tpu_custom_call.1} parent=5 // pred_check_branch
        %210 = sbr.rel (%p208) target = $region16
      $region15: #{tpu_custom_call.1} parent=5 // pred_region
        // Predicated region
        $region17: #{tpu_custom_call.1} parent=15 // pred_check
          %p211 = pneg %p54
        $region18: #{tpu_custom_call.1} parent=15 // pred_check_branch
          %213 = sbr.rel (%p211) target = $region20
        $region19: #{tpu_custom_call.1} parent=15 // pred_region
          %s214 = sand.u32 %s44, 1
          %s215 = scalar_lea.sflag [#allocation4], %s214
          %s216 = sand.u32 %s44, 1
          %s217 = smul.addr %s216, 64
          %s218 = scalar_lea.vmem [#allocation3], %s217
          %s219 = smul.u32 8, %s27
          %s221 = ssub.s32 1024, 1024
          %222 = vsyncadd %s215, %s221
          %s223 = sadd.s32 %s28, %s219
          %s224 = smul.addr %s223, 128
          %s225 = scalar_lea.hbm %s0, %s224
          %s226 = sshll.u32 %s218, 4
          %s227 = int_to_ptr.vmem [resolvable:$true] %s226
          %232 = dma.hbm_to_vmem [thread:$0]  %s225, 1024, %s227, %s215, 128, 128, 8
        $region20: #{tpu_custom_call.1} parent=15 // pred_fallthru
          _
        // Predicated region
        $region21: #{tpu_custom_call.1} parent=15 // pred_check
          %p233 = pneg %p82
        $region22: #{tpu_custom_call.1} parent=15 // pred_check_branch
          %235 = sbr.rel (%p233) target = $region24
        $region23: #{tpu_custom_call.1} parent=15 // pred_region
          %s236 = sand.u32 %s20, 1
          %s237 = scalar_lea.sflag [#allocation7], %s236
          %s238 = sand.u32 %s72, 1
          %s239 = smul.addr %s238, 64
          %s240 = scalar_lea.vmem [#allocation6], %s239
          %s241 = smul.u32 8, %s27
          %s243 = ssub.s32 1024, 1024
          %244 = vsyncadd %s237, %s243
          %s245 = sadd.s32 %s28, %s241
          %s246 = smul.addr %s245, 128
          %s247 = scalar_lea.hbm %s1, %s246
          %s248 = sshll.u32 %s240, 4
          %s249 = int_to_ptr.vmem [resolvable:$true] %s248
          %254 = dma.hbm_to_vmem [thread:$0]  %s247, 1024, %s249, %s237, 128, 128, 8
        $region24: #{tpu_custom_call.1} parent=15 // pred_fallthru
          _
        // Predicated region
        $region25: #{tpu_custom_call.1} parent=15 // pred_check
          %p255 = pneg %p108
        $region26: #{tpu_custom_call.1} parent=15 // pred_check_branch
          %257 = sbr.rel (%p255) target = $region28
        $region27: #{tpu_custom_call.1} parent=15 // pred_region
          %p258 = scmp.lt.s32.totalorder %s27, 1
          %s259 = scalar_select %p258, %s27, 1
          %s260 = smul.addr %s259, 8
          %s261 = scalar_lea.vmem %s2, %s260
        $region28: #{tpu_custom_call.1} parent=15 // pred_fallthru
          _
        // Predicated region
        $region29: #{tpu_custom_call.1} parent=15 // pred_check
          %p262 = pneg %p134
        $region30: #{tpu_custom_call.1} parent=15 // pred_check_branch
          %264 = sbr.rel (%p262) target = $region32
        $region31: #{tpu_custom_call.1} parent=15 // pred_region
          %s265 = sand.u32 %s20, 1
          %s266 = scalar_lea.sflag [#allocation7], %s265
          %s267 = sand.u32 %s124, 1
          %s268 = smul.addr %s267, 8
          %s269 = scalar_lea.vmem [#allocation8], %s268
          %s271 = ssub.s32 128, 128
          %272 = vsyncadd %s266, %s271
          %s273 = smul.addr %s27, 128
          %s274 = scalar_lea.hbm %s3, %s273
          %s276 = sshll.u32 %s269, 4
          %s277 = int_to_ptr.vmem [resolvable:$true] %s276
          %279 = dma.hbm_to_vmem [thread:$0]  %s274, 128, %s277, %s266
        $region32: #{tpu_custom_call.1} parent=15 // pred_fallthru
          _
        // Predicated region
        $region33: #{tpu_custom_call.1} parent=15 // pred_check
          %p280 = pneg %p160
        $region34: #{tpu_custom_call.1} parent=15 // pred_check_branch
          %282 = sbr.rel (%p280) target = $region36
        $region35: #{tpu_custom_call.1} parent=15 // pred_region
          %p283 = scmp.lt.s32.totalorder %s27, 1
          %s284 = scalar_select %p283, %s27, 1
          %s285 = smul.addr %s284, 8
          %s286 = scalar_lea.vmem %s4, %s285
        $region36: #{tpu_custom_call.1} parent=15 // pred_fallthru
          _
      $region16: #{tpu_custom_call.1} parent=5 // pred_fallthru
        _
      %p287 = scmp.le.s32.totalorder 1, %s20
      %p288 = scmp.lt.s32.totalorder %s20, 3
      %p289 = pnand %p287, %p288
      %p290 = pneg %p289
      // Predicated region
      $region37: #{tpu_custom_call.1} parent=5 // pred_check
        _
      $region38: #{tpu_custom_call.1} parent=5 // pred_check_branch
        %292 = sbr.rel (%p289) target = $region40
      $region39: #{tpu_custom_call.1} parent=5 // pred_region
        %s293 = ssub.s32 %s20, 1
        %s294 = sand.u32 %s47, 1
        %s295 = scalar_lea.sflag [#allocation4], %s294
        %s296 = sand.u32 %s47, 1
        %s297 = smul.addr %s296, 64
        %s298 = scalar_lea.vmem [#allocation3], %s297
        // Predicated region
        $region41: #{tpu_custom_call.1} parent=39 // pred_check
          %p299 = pneg %p60
        $region42: #{tpu_custom_call.1} parent=39 // pred_check_branch
          %301 = sbr.rel (%p299) target = $region44
        $region43: #{tpu_custom_call.1} parent=39 // pred_region
          %302 = dma.done %s295, 1024
        $region44: #{tpu_custom_call.1} parent=39 // pred_fallthru
          _
        %s303 = sand.u32 %s25, 1
        %s304 = scalar_lea.sflag [#allocation7], %s303
        %s305 = sand.u32 %s75, 1
        %s306 = smul.addr %s305, 64
        %s307 = scalar_lea.vmem [#allocation6], %s306
        // Predicated region
        $region45: #{tpu_custom_call.1} parent=39 // pred_check
          %p308 = pneg %p88
        $region46: #{tpu_custom_call.1} parent=39 // pred_check_branch
          %310 = sbr.rel (%p308) target = $region48
        $region47: #{tpu_custom_call.1} parent=39 // pred_region
          %311 = dma.done %s304, 1024
        $region48: #{tpu_custom_call.1} parent=39 // pred_fallthru
          _
        %s312 = sand.u32 %s25, 1
        %s313 = scalar_lea.sflag [#allocation7], %s312
        %s314 = sand.u32 %s127, 1
        %s315 = smul.addr %s314, 8
        %s316 = scalar_lea.vmem [#allocation8], %s315
        // Predicated region
        $region49: #{tpu_custom_call.1} parent=39 // pred_check
          %p317 = pneg %p140
        $region50: #{tpu_custom_call.1} parent=39 // pred_check_branch
          %319 = sbr.rel (%p317) target = $region52
        $region51: #{tpu_custom_call.1} parent=39 // pred_region
          %320 = dma.done %s313, 128
        $region52: #{tpu_custom_call.1} parent=39 // pred_fallthru
          _
        %s321 = sand.u32 %s47, 1
        %s322 = scalar_lea.sflag [#allocation4], %s321
        %s323 = sand.u32 %s47, 1
        %s324 = smul.addr %s323, 64
        %s325 = scalar_lea.vmem [#allocation3], %s324
        %p326 = pneg %p60
        %p327 = pneg %p57
        %s328 = sand.u32 %s25, 1
        %s329 = scalar_lea.sflag [#allocation7], %s328
        %s330 = sand.u32 %s75, 1
        %s331 = smul.addr %s330, 64
        %s332 = scalar_lea.vmem [#allocation6], %s331
        %p333 = pneg %p88
        %p334 = pneg %p85
        %p335 = scmp.lt.s32.totalorder %s29, 1
        %s336 = scalar_select %p335, %s29, 1
        %s337 = smul.addr %s336, 8
        %s338 = scalar_lea.vmem %s2, %s337
        %p339 = pneg %p114
        %p340 = pneg %p111
        %s341 = sand.u32 %s25, 1
        %s342 = scalar_lea.sflag [#allocation7], %s341
        %s343 = sand.u32 %s127, 1
        %s344 = smul.addr %s343, 8
        %s345 = scalar_lea.vmem [#allocation8], %s344
        %p346 = pneg %p140
        %p347 = pneg %p137
        %p348 = scmp.lt.s32.totalorder %s29, 1
        %s349 = scalar_select %p348, %s29, 1
        %s350 = smul.addr %s349, 8
        %s351 = scalar_lea.vmem %s4, %s350
        %p352 = pneg %p166
        %p353 = pneg %p163
        %p354 = pneg %p192
        %p355 = pneg %p189
        %s356 = sand.u32 %s179, 1
        %s357 = scalar_lea.sflag [#allocation5], %s356
        %s358 = sand.u32 %s179, 1
        %s359 = smul.addr %s358, 8
        %s360 = scalar_lea.vmem [#allocation9], %s359
        %s361 = smul.u32 8, %s29
        %s362 = smul.u32 8, %s29
        %p363 = scmp.lt.s32.totalorder %s29, 1
        %s364 = scalar_select %p363, %s29, 1
        %s365 = smul.addr %s364, 8
        %s366 = scalar_lea.vmem %s2, %s365
        %p367 = scmp.lt.s32.totalorder %s29, 1
        %s368 = scalar_select %p367, %s29, 1
        %s369 = smul.addr %s368, 8
        %s370 = scalar_lea.vmem %s4, %s369
        %p371 = scmp.eq.s32.totalorder %s30, 0
        // Predicated region
        $region53: #{tpu_custom_call.1} parent=39 // pred_check
          %p372 = pneg %p371
        $region54: #{tpu_custom_call.1} parent=39 // pred_check_branch
          %374 = sbr.rel (%p372) target = $region56
        $region55: #{tpu_custom_call.1} parent=39 // pred_region
          %vm375 = vcmask 7168
          %376 = vst.msk [vmem:[#allocation2] sm:$0xff] %vm375, 0.0
        $region56: #{tpu_custom_call.1} parent=39 // pred_fallthru
          _
        %v377 = vld [vmem:[%s298] sm:$0xff]
        %v378 = vld [vmem:[%s298 + $0x8] sm:$0xff]
        %v379 = vld [vmem:[%s298 + $0x10] sm:$0xff]
        %v380 = vld [vmem:[%s298 + $0x18] sm:$0xff]
        %v381 = vld [vmem:[%s298 + $0x20] sm:$0xff]
        %v382 = vld [vmem:[%s298 + $0x28] sm:$0xff]
        %v383 = vld [vmem:[%s298 + $0x30] sm:$0xff]
        %v384 = vld [vmem:[%s298 + $0x38] sm:$0xff]
        %v385 = vld [vmem:[%s307] sm:$0xff]
        %v386 = vld [vmem:[%s307 + $0x8] sm:$0xff]
        %v387 = vld [vmem:[%s307 + $0x10] sm:$0xff]
        %v388 = vld [vmem:[%s307 + $0x18] sm:$0xff]
        %v389 = vld [vmem:[%s307 + $0x20] sm:$0xff]
        %v390 = vld [vmem:[%s307 + $0x28] sm:$0xff]
        %v391 = vld [vmem:[%s307 + $0x30] sm:$0xff]
        %v392 = vld [vmem:[%s307 + $0x38] sm:$0xff]
        %v393 = vmul.f32 %v377, %v385
        %v394 = vmul.f32 %v378, %v386
        %v395 = vmul.f32 %v379, %v387
        %v396 = vmul.f32 %v380, %v388
        %v397 = vmul.f32 %v381, %v389
        %v398 = vmul.f32 %v382, %v390
        %v399 = vmul.f32 %v383, %v391
        %v400 = vmul.f32 %v384, %v392
        %401 = vadd.xlane.f32.xlu0 %v393
        %v402 = vpop.xlane.xlu0 %401
        %403 = vadd.xlane.f32.xlu0 %v394
        %v404 = vpop.xlane.xlu0 %403
        %405 = vadd.xlane.f32.xlu0 %v395
        %v406 = vpop.xlane.xlu0 %405
        %407 = vadd.xlane.f32.xlu0 %v396
        %v408 = vpop.xlane.xlu0 %407
        %409 = vadd.xlane.f32.xlu0 %v397
        %v410 = vpop.xlane.xlu0 %409
        %411 = vadd.xlane.f32.xlu0 %v398
        %v412 = vpop.xlane.xlu0 %411
        %413 = vadd.xlane.f32.xlu0 %v399
        %v414 = vpop.xlane.xlu0 %413
        %415 = vadd.xlane.f32.xlu0 %v400
        %v416 = vpop.xlane.xlu0 %415
        %v417 = vmul.f32 %v377, %v377
        %v418 = vmul.f32 %v378, %v378
        %v419 = vmul.f32 %v379, %v379
        %v420 = vmul.f32 %v380, %v380
        %v421 = vmul.f32 %v381, %v381
        %v422 = vmul.f32 %v382, %v382
        %v423 = vmul.f32 %v383, %v383
        %v424 = vmul.f32 %v384, %v384
        %425 = vadd.xlane.f32.xlu0 %v417
        %v426 = vpop.xlane.xlu0 %425
        %427 = vadd.xlane.f32.xlu0 %v418
        %v428 = vpop.xlane.xlu0 %427
        %429 = vadd.xlane.f32.xlu0 %v419
        %v430 = vpop.xlane.xlu0 %429
        %431 = vadd.xlane.f32.xlu0 %v420
        %v432 = vpop.xlane.xlu0 %431
        %433 = vadd.xlane.f32.xlu0 %v421
        %v434 = vpop.xlane.xlu0 %433
        %435 = vadd.xlane.f32.xlu0 %v422
        %v436 = vpop.xlane.xlu0 %435
        %437 = vadd.xlane.f32.xlu0 %v423
        %v438 = vpop.xlane.xlu0 %437
        %439 = vadd.xlane.f32.xlu0 %v424
        %v440 = vpop.xlane.xlu0 %439
        %v441 = vmul.f32 %v385, %v385
        %v442 = vmul.f32 %v386, %v386
        %v443 = vmul.f32 %v387, %v387
        %v444 = vmul.f32 %v388, %v388
        %v445 = vmul.f32 %v389, %v389
        %v446 = vmul.f32 %v390, %v390
        %v447 = vmul.f32 %v391, %v391
        %v448 = vmul.f32 %v392, %v392
        %449 = vadd.xlane.f32.xlu0 %v441
        %v450 = vpop.xlane.xlu0 %449
        %451 = vadd.xlane.f32.xlu0 %v442
        %v452 = vpop.xlane.xlu0 %451
        %453 = vadd.xlane.f32.xlu0 %v443
        %v454 = vpop.xlane.xlu0 %453
        %455 = vadd.xlane.f32.xlu0 %v444
        %v456 = vpop.xlane.xlu0 %455
        %457 = vadd.xlane.f32.xlu0 %v445
        %v458 = vpop.xlane.xlu0 %457
        %459 = vadd.xlane.f32.xlu0 %v446
        %v460 = vpop.xlane.xlu0 %459
        %461 = vadd.xlane.f32.xlu0 %v447
        %v462 = vpop.xlane.xlu0 %461
        %463 = vadd.xlane.f32.xlu0 %v448
        %v464 = vpop.xlane.xlu0 %463
        %v465 = vmul.f32 %v426, %v450
        %v466 = vmul.f32 %v428, %v452
        %v467 = vmul.f32 %v430, %v454
        %v468 = vmul.f32 %v432, %v456
        %v469 = vmul.f32 %v434, %v458
        %v470 = vmul.f32 %v436, %v460
        %v471 = vmul.f32 %v438, %v462
        %v472 = vmul.f32 %v440, %v464
        %v473 = vmax.f32 %v465, 1e-16
        %v474 = vmax.f32 %v466, 1e-16
        %v475 = vmax.f32 %v467, 1e-16
        %v476 = vmax.f32 %v468, 1e-16
        %v477 = vmax.f32 %v469, 1e-16
        %v478 = vmax.f32 %v470, 1e-16
        %v479 = vmax.f32 %v471, 1e-16
        %v480 = vmax.f32 %v472, 1e-16
        %v481 = vrsqrt.pop %v473
        %v482 = vrsqrt.pop %v474
        %v483 = vrsqrt.pop %v475
        %v484 = vrsqrt.pop %v476
        %v485 = vrsqrt.pop %v477
        %v486 = vrsqrt.pop %v478
        %v487 = vrsqrt.pop %v479
        %v488 = vrsqrt.pop %v480
        %v489 = vmul.f32 %v402, %v481
        %v490 = vmul.f32 %v404, %v482
        %v491 = vmul.f32 %v406, %v483
        %v492 = vmul.f32 %v408, %v484
        %v493 = vmul.f32 %v410, %v485
        %v494 = vmul.f32 %v412, %v486
        %v495 = vmul.f32 %v414, %v487
        %v496 = vmul.f32 %v416, %v488
        %s497 = smul.u32 %s30, 8
        %v498 = vlaneseq
        %v499 = vand.u32 %v498, 127
        %v500 = vstv %s497
        %v501 = vadd.s32 %v500, %v499
        %vm502 = vcmp.lt.s32.totalorder %v501, 8
        %v511 = vlaneseq
        %v512 = vshrl.u32 %v511, 7
        %v513 = vsub.s32 %v499, %v512
        %v514 = vrot.slane %v489, %v513
        %v515 = vlaneseq
        %v516 = vshrl.u32 %v515, 7
        %v517 = vsub.s32 %v499, %v516
        %v518 = vrot.slane %v490, %v517
        %v519 = vlaneseq
        %v520 = vshrl.u32 %v519, 7
        %v521 = vsub.s32 %v499, %v520
        %v522 = vrot.slane %v491, %v521
        %v523 = vlaneseq
        %v524 = vshrl.u32 %v523, 7
        %v525 = vsub.s32 %v499, %v524
        %v526 = vrot.slane %v492, %v525
        %v527 = vlaneseq
        %v528 = vshrl.u32 %v527, 7
        %v529 = vsub.s32 %v499, %v528
        %v530 = vrot.slane %v493, %v529
        %v531 = vlaneseq
        %v532 = vshrl.u32 %v531, 7
        %v533 = vsub.s32 %v499, %v532
        %v534 = vrot.slane %v494, %v533
        %v535 = vlaneseq
        %v536 = vshrl.u32 %v535, 7
        %v537 = vsub.s32 %v499, %v536
        %v538 = vrot.slane %v495, %v537
        %v539 = vlaneseq
        %v540 = vshrl.u32 %v539, 7
        %v541 = vsub.s32 %v499, %v540
        %v542 = vrot.slane %v496, %v541
        %vm543 = vcmask 1041409
        %v544 = vsel %vm543, %v518, %v514
        %vm545 = vcmask 1042434
        %v546 = vsel %vm545, %v522, %v544
        %vm547 = vcmask 1043459
        %v548 = vsel %vm547, %v526, %v546
        %vm549 = vcmask 1044484
        %v550 = vsel %vm549, %v530, %v548
        %vm551 = vcmask 1045509
        %v552 = vsel %vm551, %v534, %v550
        %vm553 = vcmask 1046534
        %v554 = vsel %vm553, %v538, %v552
        %vm555 = vcmask 1047559
        %v556 = vsel %vm555, %v542, %v554
        %v558 = vsel %vm502, %v556, 0.0
        %v559 = vld [vmem:[#allocation2] sm:$0xff]
        %vm560 = vcmask 64512
        %v561 = vsel %vm560, %v558, 0.0
        %562 = vadd.xlane.f32.xlu0 %v561
        %v563 = vpop.xlane.xlu0 %562
        %v564 = vadd.f32 %v559, %v563
        %vm565 = vcmask 7168
        %566 = vst.msk [vmem:[#allocation2] sm:$0xff] %vm565, %v564
        // Predicated region
        $region57: #{tpu_custom_call.1} parent=39 // pred_check
          %p567 = pneg %p371
        $region58: #{tpu_custom_call.1} parent=39 // pred_check_branch
          %569 = sbr.rel (%p567) target = $region60
        $region59: #{tpu_custom_call.1} parent=39 // pred_region
          %v570 = vld [vmem:[#allocation2] sm:$0xff]
          %v571 = vmul.f32 %v570, 0.125
          %v572 = vsub.f32 1.0, %v571
          %v573 = vld [vmem:[%s366] sm:$0xff]
          %v574 = vld [vmem:[%s316] sm:$0xff]
          %v575 = vmul.f32 %v573, %v574
          %576 = vadd.xlane.f32.xlu0 %v575
          %v577 = vpop.xlane.xlu0 %576
          %v578 = vmul.f32 %v573, %v573
          %579 = vadd.xlane.f32.xlu0 %v578
          %v580 = vpop.xlane.xlu0 %579
          %v581 = vmul.f32 %v574, %v574
          %582 = vadd.xlane.f32.xlu0 %v581
          %v583 = vpop.xlane.xlu0 %582
          %v584 = vmul.f32 %v580, %v583
          %v585 = vmax.f32 %v584, 1e-16
          %v586 = vrsqrt.pop %v585
          %v587 = vmul.f32 %v577, %v586
          %v588 = vsub.f32 1.0, %v587
          %v589 = vsub.f32 %v588, %v572
          %v590 = vxor.u32 %v589, 2147483648
          %v591 = vmul.f32 %v590, 1.442695
          %v592 = vpow.pop %v591
          %v593 = vadd.f32 %v592, 1.0
          %v594 = vrcp.pop %v593
          %v595 = vmul.f32 1.0, %v594
          %v596 = vmul.f32 %v595, %v588
          %v597 = vsub.f32 1.0, %v595
          %v598 = vmul.f32 %v597, %v572
          %v599 = vadd.f32 %v596, %v598
          %v600 = vsub.f32 0.5, %v599
          %v601 = vmax.f32 %v600, 0.0
          %v602 = vld [vmem:[%s370] sm:$0xff]
          %vm603 = vcmp.gt.f32.partialorder %v602, 0.5
          %v604 = vmul.f32 %v599, %v599
          %v605 = vsel %vm603, %v604, 0.0
          %v606 = vmul.f32 %v601, %v601
          %608 = vrot.lane.b32.xlu0 %v606, 1
          %v609 = vpop.permute.xlu0 %608
          %v611 = vsel %vm603, %v609, 0.0
          %613 = vrot.lane.b32.xlu0 %v611, 127
          %v614 = vpop.permute.xlu0 %613
          %v616 = vadd.f32 %v605, %v614
          %v617 = vsel %vm565, %v616, 0.0
          %618 = vadd.xlane.f32.xlu0 %v617
          %v619 = vpop.xlane.xlu0 %618
          %v620 = vrot.slane %v619, 4
          %v621 = vadd.f32 %v619, %v620
          %v622 = vrot.slane %v621, 2
          %v623 = vadd.f32 %v621, %v622
          %v624 = vrot.slane %v623, 1
          %v625 = vadd.f32 %v623, %v624
          %s626 = vtos %v625
          %v627 = vstv %s626
          %628 = vst [vmem:[%s360] sm:$0xff] %v627
        $region60: #{tpu_custom_call.1} parent=39 // pred_fallthru
          _
        %s629 = sand.u32 %s179, 1
        %s630 = scalar_lea.sflag [#allocation5], %s629
        %s631 = sand.u32 %s179, 1
        %s632 = smul.addr %s631, 8
        %s633 = scalar_lea.vmem [#allocation9], %s632
        // Predicated region
        $region61: #{tpu_custom_call.1} parent=39 // pred_check
          %p634 = pneg %p189
        $region62: #{tpu_custom_call.1} parent=39 // pred_check_branch
          %636 = sbr.rel (%p634) target = $region64
        $region63: #{tpu_custom_call.1} parent=39 // pred_region
          %s638 = ssub.s32 128, 128
          %639 = vsyncadd %s630, %s638
          %s640 = smul.addr %s29, 128
          %s641 = scalar_lea.hbm %s5, %s640
          %s643 = sshll.u32 %s633, 4
          %s644 = int_to_ptr.vmem [resolvable:$true] %s643
          %646 = dma.vmem_to_hbm [thread:$0]  %s644, 128, %s641, %s630
        $region64: #{tpu_custom_call.1} parent=39 // pred_fallthru
          _
      $region40: #{tpu_custom_call.1} parent=5 // pred_fallthru
        _
      %p647 = scmp.le.s32.totalorder 2, %s20
      // Predicated region
      $region65: #{tpu_custom_call.1} parent=5 // pred_check
        %p648 = pneg %p647
      $region66: #{tpu_custom_call.1} parent=5 // pred_check_branch
        %650 = sbr.rel (%p648) target = $region68
      $region67: #{tpu_custom_call.1} parent=5 // pred_region
        %s651 = ssub.s32 %s20, 2
        // Predicated region
        $region69: #{tpu_custom_call.1} parent=67 // pred_check
          %p652 = pneg %p195
        $region70: #{tpu_custom_call.1} parent=67 // pred_check_branch
          %654 = sbr.rel (%p652) target = $region72
        $region71: #{tpu_custom_call.1} parent=67 // pred_region
          %s655 = sand.u32 %s180, 1
          %s656 = scalar_lea.sflag [#allocation5], %s655
          %s657 = sand.u32 %s180, 1
          %s658 = smul.addr %s657, 8
          %s659 = scalar_lea.vmem [#allocation9], %s658
          %660 = dma.done %s656, 128
        $region72: #{tpu_custom_call.1} parent=67 // pred_fallthru
          _
      $region68: #{tpu_custom_call.1} parent=5 // pred_fallthru
        _
    $region6: #{tpu_custom_call.1} parent=1 // loop_footer
      %s24 = sadd.s32 1, %s20
    $region7: #{tpu_custom_call.1} parent=1 // loop_footer_branch
      %19 = sbr.rel target = $region3
    $region8: #{tpu_custom_call.1} parent=1 // loop_exit
      _
    %661 = vsyncpa [#allocation4], 1
    %s662 = scalar_lea.sflag [#allocation4], 1
    %663 = vsyncpa %s662, 1
    %664 = vsyncpa [#allocation7], 1
    %s665 = scalar_lea.sflag [#allocation7], 1
    %666 = vsyncpa %s665, 1
    %667 = vsyncpa [#allocation5], 1
    %s668 = scalar_lea.sflag [#allocation5], 1
    %669 = vsyncpa %s668, 1

</llo_original>
